<compile_context>
chip_gen: v7x
topology: tpu7x:2x2x1
jax: 0.10.0
libtpu: 0.0.40
codegen_flags: <defaults>
</compile_context>

<pallas_src>
import functools

import jax
import jax.numpy as jnp
import numpy as np
from jax.experimental import pallas as pl
from jax.experimental.pallas import tpu as pltpu

# Scoped-VMEM request: above the 32 MiB default, below v7x's 64 MiB physical,
# trivially fine on v5e/v6e (128 MiB).
_VMEM_LIMIT = 48 * 1024 * 1024


def _round_up(x, m):
    return (x + m - 1) // m * m


# ----------------------------------------------------------------------------
# Generic tiled matmul-with-bias pass (pass 0 and pass 2).
# bf16 MXU operands, f32 accumulation, f32 bias add, configurable out dtype.
# ----------------------------------------------------------------------------
def _matmul_bias_kernel(x_ref, w_ref, b_ref, o_ref):
    o_ref[...] = (jnp.dot(x_ref[...], w_ref[...],
                          preferred_element_type=jnp.float32)
                  + b_ref[...]).astype(o_ref.dtype)


def matmul_bias(x, w, b, *, tm=512, tn=1024, out_dtype=jnp.float32):
    """out = x @ w + b.  x:(M,K) bf16, w:(K,N) bf16, b:(1,N) f32.

    Grid is (N//tn, M//tm) with the weight column-block index depending only
    on the OUTER axis: each W tile is DMA'd exactly once and stays resident
    while the (smaller) activation row tiles stream on the inner axis -- this
    removes the W re-streaming flagged in the perf review.  512x1024 tiles
    (~85% of HBM roofline per the measured data); with bf16 operands the
    double-buffered working set stays ~10 MiB, safe on all of v5e/v6e/v7x.
    """
    M, K = x.shape
    N = w.shape[1]
    tm = min(tm, M)
    while M % tm != 0:          # M is a multiple of 8 (padded rows)
        tm -= 8
    tn = min(tn, N)
    while N % tn != 0:          # N is a multiple of 128 (padded lanes)
        tn -= 128

    grid_spec = pltpu.PrefetchScalarGridSpec(
        num_scalar_prefetch=0,
        grid=(N // tn, M // tm),                      # weight block OUTER
        in_specs=[
            pl.BlockSpec((tm, K), lambda j, i: (i, 0)),
            pl.BlockSpec((K, tn), lambda j, i: (0, j)),
            pl.BlockSpec((1, tn), lambda j, i: (0, j)),
        ],
        out_specs=pl.BlockSpec((tm, tn), lambda j, i: (i, j)),
    )
    return pl.pallas_call(
        _matmul_bias_kernel,
        out_shape=jax.ShapeDtypeStruct((M, N), out_dtype),
        grid_spec=grid_spec,
        compiler_params=pltpu.CompilerParams(
            dimension_semantics=("parallel", "parallel"),
            vmem_limit_bytes=_VMEM_LIMIT),
    )(x, w, b)


# ----------------------------------------------------------------------------
# Sequential GRU recurrence pass.
# grid = (batch_splits [parallel], T // tc [arbitrary]); h carried in VMEM.
# ----------------------------------------------------------------------------
def _gru_recurrence_kernel(gx_ref, h0_ref, b_hn_ref, w_h_hbm_ref,
                           h_out_ref, h_scr, w_h_vmem, dma_sem, *, unroll):
    """One grid step == one chunk of `tc` timesteps for one batch split."""
    c = pl.program_id(1)        # time-chunk index
    hp = h_scr.shape[1]

    @pl.when(c == 0)
    def _():
        # Fetch the grid-invariant fused [W_hr|W_hz|W_hn] exactly once per
        # batch split into a SINGLE-buffered bf16 VMEM scratch (the pipeline
        # would otherwise double-buffer ~12 MiB of f32 on every chip; this is
        # the v7x 64 MiB-VMEM fix from the review).
        cp = pltpu.make_async_copy(w_h_hbm_ref, w_h_vmem, dma_sem.at[0])
        cp.start()
        cp.wait()
        h_scr[...] = h0_ref[...]

    tc = gx_ref.shape[0]

    def step(i, h):
        gx = gx_ref[i].astype(jnp.float32)                        # (Bs, 3Hp)
        # Do NOT hoist the weight read out of the (unrolled) loop: letting
        # Mosaic stream it from VMEM per matmul keeps vreg pressure bounded.
        gh = jnp.dot(h.astype(jnp.bfloat16), w_h_vmem[...],
                     preferred_element_type=jnp.float32)          # (Bs, 3Hp)
        # PyTorch GRU gate order (r, z, n).  b_ir+b_hr, b_iz+b_hz, b_in were
        # folded into gx by the hoisted input projection; only b_hn must stay
        # inside the r * (.) term.
        r = jax.nn.sigmoid(gx[:, :hp] + gh[:, :hp])
        z = jax.nn.sigmoid(gx[:, hp:2 * hp] + gh[:, hp:2 * hp])
        n = jnp.tanh(gx[:, 2 * hp:] + r * (gh[:, 2 * hp:] + b_hn_ref[...]))
        h_new = (1.0 - z) * n + z * h                             # f32 carry
        h_out_ref[i] = h_new.astype(h_out_ref.dtype)              # bf16 hids
        return h_new

    # Partial unroll (review): keeps LLO scheduling visibility without the
    # code-size / live-range blowup of a full unroll.
    h_scr[...] = jax.lax.fori_loop(0, tc, step, h_scr[...], unroll=unroll)


def gru_recurrence(gates_x, h0, w_h_cat, b_hn, *, time_chunk=32,
                   batch_splits=1, unroll=4):
    """gates_x (Tp,Bp,3Hp) bf16, h0 (Bp,Hp) f32, w_h_cat (Hp,3Hp) bf16,
    b_hn (1,Hp) f32  ->  hids (Tp,Bp,Hp) bf16.

    `batch_splits` adds a leading "parallel" grid axis over batch shards so
    v7x can run the independent batch rows on both TensorCores; on v5e/v6e
    (1 TC) the shards just run back-to-back.
    """
    Tp, Bp, H3 = gates_x.shape
    Hp = h0.shape[1]
    S = batch_splits
    Bs = Bp // S

    tc = min(time_chunk, Tp)
    while Tp % tc != 0:
        tc -= 1

    kernel = functools.partial(_gru_recurrence_kernel, unroll=unroll)
    grid_spec = pltpu.PrefetchScalarGridSpec(
        num_scalar_prefetch=0,
        grid=(S, Tp // tc),
        in_specs=[
            pl.BlockSpec((tc, Bs, H3), lambda s, c: (c, s, 0)),   # gates chunk
            pl.BlockSpec((Bs, Hp), lambda s, c: (s, 0)),          # init hidden
            pl.BlockSpec((1, Hp), lambda s, c: (0, 0)),           # b_hn
            pl.BlockSpec(memory_space=pl.ANY),                    # W_h in HBM
        ],
        out_specs=pl.BlockSpec((tc, Bs, Hp), lambda s, c: (c, s, 0)),
        scratch_shapes=[
            pltpu.VMEM((Bs, Hp), jnp.float32),      # carried hidden state
            pltpu.VMEM((Hp, H3), jnp.bfloat16),     # single-buffered W_h
            pltpu.SemaphoreType.DMA((1,)),
        ],
    )
    return pl.pallas_call(
        kernel,
        out_shape=jax.ShapeDtypeStruct((Tp, Bp, Hp), jnp.bfloat16),
        grid_spec=grid_spec,
        compiler_params=pltpu.CompilerParams(
            dimension_semantics=("parallel", "arbitrary"),
            vmem_limit_bytes=_VMEM_LIMIT),
    )(gates_x, h0, b_hn, w_h_cat)


# ----------------------------------------------------------------------------
# Full Decoder.forward (eval mode).
# ----------------------------------------------------------------------------
def decoder_forward(params, init_hidden, context, input_ids, *,
                    time_chunk=32, batch_splits=1, unroll=4,
                    logits_dtype=jnp.float32):
    """init_hidden (B,H) f32, context (B,C) or None, input_ids (B,T) int32
    -> logits (B, T, V).  Pass batch_splits=2 on v7x to use both TensorCores
    for the sequential pass (no-op gain, small pad overhead, on v5e/v6e)."""
    B, T = input_ids.shape
    H = params["w_hr"].shape[0]
    V = params["w_out"].shape[1]
    S = max(1, int(batch_splits))

    # --- glue (plain JAX): embedding lookup, context repeat + concat --------
    emb = jnp.take(params["embedding"], input_ids, axis=0)            # (B,T,E)
    if context is not None:
        rep = jnp.broadcast_to(context[:, None, :],
                               (B, T, context.shape[-1]))             # (B,T,C)
        x = jnp.concatenate([emb, rep], axis=2)                       # (B,T,E+C)
    else:
        x = emb
    # F.dropout(x, 0.5, self.training): eval mode -> identity.
    # TODO(synk): training-mode dropout (pltpu.prng_seed/prng_random_bits mask)
    # is not implemented.
    x_tm = jnp.transpose(x, (1, 0, 2)).astype(jnp.float32)            # (T,B,Din)
    Din = x_tm.shape[-1]

    # --- pad to TPU-friendly shapes ------------------------------------------
    per = -(-B // S)                       # rows per batch split
    Bs = _round_up(per, 8)
    Bp = S * Bs
    Tp = _round_up(T, 8)                   # extra (junk) trailing steps only
    Hp = _round_up(H, 128)
    Dp = _round_up(Din, 128)
    Vp = _round_up(V, 128)

    def pad2(w, r, c):
        w = jnp.asarray(w, jnp.float32)
        return jnp.zeros((r, c), jnp.float32).at[:w.shape[0], :w.shape[1]].set(w)

    # Activations / state, laid out per batch split.
    x_sp = jnp.zeros((Tp, S * per, Din), jnp.float32).at[:T, :B, :].set(x_tm)
    x_sp = x_sp.reshape(Tp, S, per, Din)
    x_pad = jnp.zeros((Tp, S, Bs, Dp), jnp.float32)
    x_pad = x_pad.at[:, :, :per, :Din].set(x_sp).reshape(Tp, Bp, Dp)

    h0_sp = jnp.zeros((S * per, H), jnp.float32).at[:B, :].set(
        jnp.asarray(init_hidden, jnp.float32)).reshape(S, per, H)
    h0_pad = jnp.zeros((S, Bs, Hp), jnp.float32)
    h0_pad = h0_pad.at[:, :per, :H].set(h0_sp).reshape(Bp, Hp)

    # Fused/packed weights, bf16 for the MXU (zero pads -> padded lanes inert).
    w_i_cat = jnp.concatenate([pad2(params["w_ir"], Dp, Hp),
                               pad2(params["w_iz"], Dp, Hp),
                               pad2(params["w_in"], Dp, Hp)],
                              axis=1).astype(jnp.bfloat16)             # (Dp,3Hp)
    b_x_cat = jnp.concatenate([pad2(params["b_ir"] + params["b_hr"], 1, Hp),
                               pad2(params["b_iz"] + params["b_hz"], 1, Hp),
                               pad2(params["b_in"], 1, Hp)], axis=1)   # (1,3Hp) f32
    w_h_cat = jnp.concatenate([pad2(params["w_hr"], Hp, Hp),
                               pad2(params["w_hz"], Hp, Hp),
                               pad2(params["w_hn"], Hp, Hp)],
                              axis=1).astype(jnp.bfloat16)             # (Hp,3Hp)
    b_hn = pad2(params["b_hn"], 1, Hp)                                 # f32
    w_out = pad2(params["w_out"], Hp, Vp).astype(jnp.bfloat16)
    b_out = pad2(params["b_out"], 1, Vp)                               # f32

    # --- pass 0: hoisted input projection (bf16 MXU, bf16 gates) ------------
    gates_x = matmul_bias(x_pad.astype(jnp.bfloat16).reshape(Tp * Bp, Dp),
                          w_i_cat, b_x_cat, out_dtype=jnp.bfloat16)
    gates_x = gates_x.reshape(Tp, Bp, 3 * Hp)

    # --- pass 1: sequential GRU recurrence -----------------------------------
    # NOTE: per-step matmul rows = Bs; the MXU is under-filled below ~128/256
    # rows -- batch more sequences at the call-site if the product allows.
    hids = gru_recurrence(gates_x, h0_pad, w_h_cat, b_hn,
                          time_chunk=time_chunk, batch_splits=S,
                          unroll=unroll)                                # (Tp,Bp,Hp) bf16

    # --- pass 2: parallel vocab projection (W_out streamed once) -------------
    dec = matmul_bias(hids.reshape(Tp * Bp, Hp), w_out, b_out,
                      out_dtype=logits_dtype)                           # (Tp*Bp,Vp)
    dec = dec.reshape(Tp, S, Bs, Vp)[:T, :, :per, :V]                   # drop pads
    dec = dec.reshape(T, S * per, V)[:, :B, :]
    # TODO(synk): the final (T,B,V)->(B,T,V) transpose stays in XLA; folding it
    # into pass-2 out_specs needs an in-kernel leading-dim transpose whose
    # Mosaic lowering we could not validate here.
    return jnp.transpose(dec, (1, 0, 2))                                # (B,T,V)


# ----------------------------------------------------------------------------
# Pure-JAX reference (lax.scan GRU, f32) for correctness check.
# ----------------------------------------------------------------------------
def decoder_forward_ref(params, init_hidden, context, input_ids):
    B, T = input_ids.shape
    emb = jnp.take(params["embedding"], input_ids, axis=0)
    if context is not None:
        rep = jnp.broadcast_to(context[:, None, :], (B, T, context.shape[-1]))
        x = jnp.concatenate([emb, rep], axis=2)
    else:
        x = emb
    x_tm = jnp.transpose(x, (1, 0, 2)).astype(jnp.float32)

    def step(h, x_t):
        r = jax.nn.sigmoid(x_t @ params["w_ir"] + params["b_ir"]
                           + h @ params["w_hr"] + params["b_hr"])
        z = jax.nn.sigmoid(x_t @ params["w_iz"] + params["b_iz"]
                           + h @ params["w_hz"] + params["b_hz"])
        n = jnp.tanh(x_t @ params["w_in"] + params["b_in"]
                     + r * (h @ params["w_hn"] + params["b_hn"]))
        h_new = (1.0 - z) * n + z * h
        dec = h_new @ params["w_out"] + params["b_out"]
        return h_new, dec

    _, dec_tm = jax.lax.scan(step, init_hidden.astype(jnp.float32), x_tm)
    return jnp.transpose(dec_tm, (1, 0, 2))


def make_params(key, vocab_size, emb_size, input_size, hidden_size):
    """Deterministic parameter init mimicking Decoder.__init__/init_weights."""
    keys = jax.random.split(key, 16)
    ortho = jax.nn.initializers.orthogonal()
    bnd = 1.0 / np.sqrt(hidden_size)      # PyTorch GRU default bias init bound
    p = {
        "embedding": jax.random.normal(keys[0], (vocab_size, emb_size),
                                       jnp.float32) * 0.1,
        "w_ir": ortho(keys[1], (input_size, hidden_size), jnp.float32),
        "w_iz": ortho(keys[2], (input_size, hidden_size), jnp.float32),
        "w_in": ortho(keys[3], (input_size, hidden_size), jnp.float32),
        "w_hr": ortho(keys[4], (hidden_size, hidden_size), jnp.float32),
        "w_hz": ortho(keys[5], (hidden_size, hidden_size), jnp.float32),
        "w_hn": ortho(keys[6], (hidden_size, hidden_size), jnp.float32),
        "b_ir": jax.random.uniform(keys[7], (1, hidden_size), jnp.float32, -bnd, bnd),
        "b_iz": jax.random.uniform(keys[8], (1, hidden_size), jnp.float32, -bnd, bnd),
        "b_in": jax.random.uniform(keys[9], (1, hidden_size), jnp.float32, -bnd, bnd),
        "b_hr": jax.random.uniform(keys[10], (1, hidden_size), jnp.float32, -bnd, bnd),
        "b_hz": jax.random.uniform(keys[11], (1, hidden_size), jnp.float32, -bnd, bnd),
        "b_hn": jax.random.uniform(keys[12], (1, hidden_size), jnp.float32, -bnd, bnd),
        "w_out": jax.random.uniform(keys[13], (hidden_size, vocab_size),
                                    jnp.float32, -0.1, 0.1),
        "b_out": jnp.zeros((1, vocab_size), jnp.float32),
    }
    return p


if __name__ == "__main__":
    # Small shapes consistent with the module:
    B, T = 4, 8           # batch, maxlen
    E, C = 16, 16         # embedding dim, context (latent z) dim
    H = 32                # hidden_size
    V = 64                # vocab_size
    Din = E + C           # GRU input_size (emb concat context)

    key = jax.random.PRNGKey(0)
    k_par, k_ids, k_h0, k_ctx = jax.random.split(key, 4)

    params = make_params(k_par, V, E, Din, H)
    input_ids = jax.random.randint(k_ids, (B, T), 0, V, dtype=jnp.int32)
    init_hidden = jax.random.normal(k_h0, (B, H), jnp.float32)
    context = jax.random.normal(k_ctx, (B, C), jnp.float32)

    ref = jax.block_until_ready(
        decoder_forward_ref(params, init_hidden, context, input_ids))

    # Default path (single batch split, as on v5e/v6e).
    decoded = jax.block_until_ready(
        decoder_forward(params, init_hidden, context, input_ids))
    assert decoded.shape == (B, T, V), decoded.shape
    # bf16 MXU operands / bf16 gates & hids -> looser tolerance vs f32 ref.
    np.testing.assert_allclose(np.asarray(decoded), np.asarray(ref),
                               rtol=5e-2, atol=5e-2)

    # v7x-style 2-way batch split of the sequential pass (runs, just without
    # the megacore speedup, on 1-TensorCore chips).
    decoded2 = jax.block_until_ready(
        decoder_forward(params, init_hidden, context, input_ids,
                        batch_splits=2))
    np.testing.assert_allclose(np.asarray(decoded2), np.asarray(ref),
                               rtol=5e-2, atol=5e-2)

    print("KERNEL_OK")
</pallas_src>

<mosaic_0001>
module attributes {stable_mosaic.version = 11 : i64} {
  func.func @_matmul_bias_kernel(%arg0: i32, %arg1: i32, %arg2: memref<64x128xbf16, #tpu.memory_space<vmem>>, %arg3: memref<128x384xbf16, #tpu.memory_space<vmem>>, %arg4: memref<1x384xf32, #tpu.memory_space<vmem>>, %arg5: memref<64x384xbf16, #tpu.memory_space<vmem>>) attributes {dimension_semantics = [#tpu.dimension_semantics<parallel>, #tpu.dimension_semantics<parallel>], iteration_bounds = array<i64: 1, 1>, scalar_prefetch = 0 : i64, scratch_operands = 0 : i64, tpu.core_type = #tpu.core_type<tc>, window_params = [{transform_indices = @transform_0, window_bounds = array<i64: 64, 128>}, {transform_indices = @transform_1, window_bounds = array<i64: 128, 384>}, {transform_indices = @transform_2, window_bounds = array<i64: 1, 384>}, {transform_indices = @transform_3, window_bounds = array<i64: 64, 384>}]} {
    %c0 = arith.constant 0 : index
    %c0_0 = arith.constant 0 : index
    %0 = vector.load %arg2[%c0, %c0_0] : memref<64x128xbf16, #tpu.memory_space<vmem>>, vector<64x128xbf16>
    %c0_1 = arith.constant 0 : index
    %c0_2 = arith.constant 0 : index
    %1 = vector.load %arg3[%c0_1, %c0_2] : memref<128x384xbf16, #tpu.memory_space<vmem>>, vector<128x384xbf16>
    %cst = arith.constant dense<0.000000e+00> : vector<64x384xf32>
    %2 = tpu.matmul %0, %1, %cst {dimension_numbers = #tpu.dot_dimension_numbers<[1], [0], [0], [1], [0, 0, 1, 1], [], []>} : vector<64x128xbf16>, vector<128x384xbf16>, vector<64x384xf32> -> vector<64x384xf32>
    %c0_3 = arith.constant 0 : index
    %c0_4 = arith.constant 0 : index
    %3 = vector.load %arg4[%c0_3, %c0_4] : memref<1x384xf32, #tpu.memory_space<vmem>>, vector<1x384xf32>
    %4 = vector.broadcast %3 : vector<1x384xf32> to vector<64x384xf32>
    %5 = arith.addf %2, %4 : vector<64x384xf32>
    %6 = arith.truncf %5 : vector<64x384xf32> to vector<64x384xbf16>
    %c0_5 = arith.constant 0 : index
    %c0_6 = arith.constant 0 : index
    %7 = vector.load %arg5[%c0_5, %c0_6] : memref<64x384xbf16, #tpu.memory_space<vmem>>, vector<64x384xbf16>
    tpu.vector_store %arg5[%c0_5, %c0_6], %6 {strides = array<i32>} : memref<64x384xbf16, #tpu.memory_space<vmem>>, vector<64x384xbf16>,
    return
  }
  func.func @transform_0(%arg0: i32, %arg1: i32) -> (i32, i32) {
    %c0_i32 = arith.constant 0 : i32
    %c0_i32_0 = arith.constant 0 : i32
    return %arg1, %c0_i32 : i32, i32
  }
  func.func @transform_1(%arg0: i32, %arg1: i32) -> (i32, i32) {
    %c0_i32 = arith.constant 0 : i32
    %c0_i32_0 = arith.constant 0 : i32
    return %c0_i32, %arg0 : i32, i32
  }
  func.func @transform_2(%arg0: i32, %arg1: i32) -> (i32, i32) {
    %c0_i32 = arith.constant 0 : i32
    %c0_i32_0 = arith.constant 0 : i32
    return %c0_i32, %arg0 : i32, i32
  }
  func.func @transform_3(%arg0: i32, %arg1: i32) -> (i32, i32) {
    %c0_i32 = arith.constant 0 : i32
    return %arg1, %arg0 : i32, i32
  }
}

</mosaic_0001>

<llo_original>
// kernel: tpu_custom_call.1
$region0: #{tpu_custom_call.1}
  #allocation0 [shape = 'u32[]', space=smem, size = 0x4, offset = 0x4, fixed_abs, tag = 'smem constant byte address 0x4 - core index']
  #allocation1 [shape = 'u32[144,128]{1,0:T(1,128)}', space=vmem, size = 0x12000, scoped, tag = 'internal scratch']
  %s0 = inlined_call_operand.hbm [shape: bf16[64,128], index: 0, kind: input, shape index: {}]
  %s1 = inlined_call_operand.hbm [shape: bf16[128,384], index: 1, kind: input, shape index: {}]
  %s2 = inlined_call_operand.vmem [shape: f32[1,384], index: 2, kind: input, shape index: {}]
  %s3 = inlined_call_operand.hbm [shape: bf16[64,384], index: 3, kind: output, shape index: {}]
  %s4 = sld [smem:[#allocation0]]
  $region30: #{tpu_custom_call.1} parent=0
    _
  %s6 = ssub.s32 1, %s4
  %s7 = scalar_select 0, %s6, %s4
  $region1: #{tpu_custom_call.1} parent=0
    #allocation2 [shape = 'u8[16384]{0}', space=vmem, size = 0x4000, scoped, tag = 'input window, operand 0, single buffered']
    #allocation3 [shape = 's32[1]{0}', space=sflag, size = 0x4, scoped, tag = 'scoped memory for tpu_custom_call.1']
    #allocation4 [shape = 's32[1]{0}', space=sflag, size = 0x4, scoped, tag = 'scoped memory for tpu_custom_call.1']
    #allocation5 [shape = 'u8[98304]{0}', space=vmem, size = 0x18000, scoped, tag = 'input window, operand 1, single buffered']
    #allocation6 [shape = 's32[1]{0}', space=sflag, size = 0x4, scoped, tag = 'scoped memory for tpu_custom_call.1']
    #allocation7 [shape = 'u8[49152]{0}', space=vmem, size = 0xc000, scoped, tag = 'output window, operand 0, single buffered']
    %8 = vsyncpa [#allocation3], 0
    %9 = vsyncpa [#allocation6], 0
    %10 = vsyncpa [#allocation4], 0
    // Predicated region
    $region2: #{tpu_custom_call.1} parent=1 // pred_check
      _
    $region3: #{tpu_custom_call.1} parent=1 // pred_check_branch
      %12 = sbr.rel (0) target = $region5
    $region4: #{tpu_custom_call.1} parent=1 // pred_region
      %s14 = ssub.s32 512, 512
      %15 = vsyncadd [#allocation3], %s14
      %s16 = sshll.u32 [#allocation2], 4
      %s17 = int_to_ptr.vmem [resolvable:$true] %s16
      %22 = dma.hbm_to_vmem [thread:$0]  %s0, 512, %s17, [#allocation3], 64, 64, 4
    $region5: #{tpu_custom_call.1} parent=1 // pred_fallthru
      _
    // Predicated region
    $region6: #{tpu_custom_call.1} parent=1 // pred_check
      _
    $region7: #{tpu_custom_call.1} parent=1 // pred_check_branch
      %24 = sbr.rel (0) target = $region9
    $region8: #{tpu_custom_call.1} parent=1 // pred_region
      %s26 = ssub.s32 3072, 3072
      %27 = vsyncadd [#allocation6], %s26
      %s28 = sshll.u32 [#allocation5], 4
      %s29 = int_to_ptr.vmem [resolvable:$true] %s28
      %34 = dma.hbm_to_vmem [thread:$0]  %s1, 3072, %s29, [#allocation6], 192, 192, 12
    $region9: #{tpu_custom_call.1} parent=1 // pred_fallthru
      _
    // Predicated region
    $region10: #{tpu_custom_call.1} parent=1 // pred_check
      _
    $region11: #{tpu_custom_call.1} parent=1 // pred_check_branch
      %36 = sbr.rel (0) target = $region13
    $region12: #{tpu_custom_call.1} parent=1 // pred_region
      _
    $region13: #{tpu_custom_call.1} parent=1 // pred_fallthru
      _
    // Predicated region
    $region14: #{tpu_custom_call.1} parent=1 // pred_check
      _
    $region15: #{tpu_custom_call.1} parent=1 // pred_check_branch
      %38 = sbr.rel (0) target = $region17
    $region16: #{tpu_custom_call.1} parent=1 // pred_region
      %39 = dma.done [#allocation3], 512
    $region17: #{tpu_custom_call.1} parent=1 // pred_fallthru
      _
    // Predicated region
    $region18: #{tpu_custom_call.1} parent=1 // pred_check
      _
    $region19: #{tpu_custom_call.1} parent=1 // pred_check_branch
      %41 = sbr.rel (0) target = $region21
    $region20: #{tpu_custom_call.1} parent=1 // pred_region
      %42 = dma.done [#allocation6], 3072
    $region21: #{tpu_custom_call.1} parent=1 // pred_fallthru
      _
    %v44 = vld [vmem:[#allocation2] sm:$0xf]
    %v45 = vld [vmem:[#allocation2 + $0x4] sm:$0xf]
    %v46 = vld [vmem:[#allocation2 + $0x8] sm:$0xf]
    %v47 = vld [vmem:[#allocation2 + $0xc] sm:$0xf]
    %v48 = vld [vmem:[#allocation2 + $0x10] sm:$0xf]
    %v49 = vld [vmem:[#allocation2 + $0x14] sm:$0xf]
    %v50 = vld [vmem:[#allocation2 + $0x18] sm:$0xf]
    %v51 = vld [vmem:[#allocation2 + $0x1c] sm:$0xf]
    %v52 = vld [vmem:[#allocation5] sm:$0xff]
    %v53 = vld [vmem:[#allocation5 + $0x8] sm:$0xf]
    %v54 = vld [vmem:[#allocation5 + $0xc] sm:$0xff]
    %v55 = vld [vmem:[#allocation5 + $0x14] sm:$0xf]
    %v56 = vld [vmem:[#allocation5 + $0x18] sm:$0xff]
    %v57 = vld [vmem:[#allocation5 + $0x20] sm:$0xf]
    %v58 = vld [vmem:[#allocation5 + $0x24] sm:$0xff]
    %v59 = vld [vmem:[#allocation5 + $0x2c] sm:$0xf]
    %v60 = vld [vmem:[#allocation5 + $0x30] sm:$0xff]
    %v61 = vld [vmem:[#allocation5 + $0x38] sm:$0xf]
    %v62 = vld [vmem:[#allocation5 + $0x3c] sm:$0xff]
    %v63 = vld [vmem:[#allocation5 + $0x44] sm:$0xf]
    %v64 = vld [vmem:[#allocation5 + $0x48] sm:$0xff]
    %v65 = vld [vmem:[#allocation5 + $0x50] sm:$0xf]
    %v66 = vld [vmem:[#allocation5 + $0x54] sm:$0xff]
    %v67 = vld [vmem:[#allocation5 + $0x5c] sm:$0xf]
    %v68 = vld [vmem:[#allocation5 + $0x60] sm:$0xff]
    %v69 = vld [vmem:[#allocation5 + $0x68] sm:$0xf]
    %v70 = vld [vmem:[#allocation5 + $0x6c] sm:$0xff]
    %v71 = vld [vmem:[#allocation5 + $0x74] sm:$0xf]
    %v72 = vld [vmem:[#allocation5 + $0x78] sm:$0xff]
    %v73 = vld [vmem:[#allocation5 + $0x80] sm:$0xf]
    %v74 = vld [vmem:[#allocation5 + $0x84] sm:$0xff]
    %v75 = vld [vmem:[#allocation5 + $0x8c] sm:$0xf]
    %v76 = vld [vmem:[#allocation5 + $0x90] sm:$0xff]
    %v77 = vld [vmem:[#allocation5 + $0x98] sm:$0xf]
    %v78 = vld [vmem:[#allocation5 + $0x9c] sm:$0xff]
    %v79 = vld [vmem:[#allocation5 + $0xa4] sm:$0xf]
    %v80 = vld [vmem:[#allocation5 + $0xa8] sm:$0xff]
    %v81 = vld [vmem:[#allocation5 + $0xb0] sm:$0xf]
    %v82 = vld [vmem:[#allocation5 + $0xb4] sm:$0xff]
    %v83 = vld [vmem:[#allocation5 + $0xbc] sm:$0xf]
    %v84 = vld [vmem:[%s2] sm:$0x7]
    %v86 = vlaneseq
    %v87 = vshrl.u32 %v86, 7
    %v88 = vsub.s32 0, %v87
    %v89 = vrot.slane %v84, %v88
    %v90 = vlaneseq
    %v91 = vshrl.u32 %v90, 7
    %v92 = vsub.s32 1, %v91
    %v93 = vrot.slane %v84, %v92
    %v94 = vlaneseq
    %v95 = vshrl.u32 %v94, 7
    %v96 = vsub.s32 2, %v95
    %v97 = vrot.slane %v84, %v96
    %v109 = vunpack.c.l.b16 %v44
    %v110 = vunpack.c.l.b16 %v45
    %v111 = vunpack.c.l.b16 %v46
    %v112 = vunpack.c.l.b16 %v47
    %v113 = vunpack.c.l.b16 %v48
    %v114 = vunpack.c.l.b16 %v49
    %v115 = vunpack.c.l.b16 %v50
    %v116 = vunpack.c.l.b16 %v51
    %v117 = vpack.c.b16 %v110, %v109
    %v118 = vpack.c.b16 %v112, %v111
    %v119 = vpack.c.b16 %v114, %v113
    %v120 = vpack.c.b16 %v116, %v115
    %v157 = vunpack.c.l.b16 %v52
    %v158 = vunpack.c.h.b16 %v52
    %v159 = vunpack.c.l.b16 %v53
    %v160 = vunpack.c.l.b16 %v54
    %v161 = vunpack.c.h.b16 %v54
    %v162 = vunpack.c.l.b16 %v55
    %v163 = vunpack.c.l.b16 %v56
    %v164 = vunpack.c.h.b16 %v56
    %v165 = vunpack.c.l.b16 %v57
    %v166 = vunpack.c.l.b16 %v58
    %v167 = vunpack.c.h.b16 %v58
    %v168 = vunpack.c.l.b16 %v59
    %v169 = vunpack.c.l.b16 %v60
    %v170 = vunpack.c.h.b16 %v60
    %v171 = vunpack.c.l.b16 %v61
    %v172 = vunpack.c.l.b16 %v62
    %v173 = vunpack.c.h.b16 %v62
    %v174 = vunpack.c.l.b16 %v63
    %v175 = vunpack.c.l.b16 %v64
    %v176 = vunpack.c.h.b16 %v64
    %v177 = vunpack.c.l.b16 %v65
    %v178 = vunpack.c.l.b16 %v66
    %v179 = vunpack.c.h.b16 %v66
    %v180 = vunpack.c.l.b16 %v67
    %v181 = vunpack.c.l.b16 %v68
    %v182 = vunpack.c.h.b16 %v68
    %v183 = vunpack.c.l.b16 %v69
    %v184 = vunpack.c.l.b16 %v70
    %v185 = vunpack.c.h.b16 %v70
    %v186 = vunpack.c.l.b16 %v71
    %v187 = vunpack.c.l.b16 %v72
    %v188 = vunpack.c.h.b16 %v72
    %v189 = vunpack.c.l.b16 %v73
    %v190 = vunpack.c.l.b16 %v74
    %v191 = vunpack.c.h.b16 %v74
    %v192 = vunpack.c.l.b16 %v75
    %v193 = vunpack.c.l.b16 %v76
    %v194 = vunpack.c.h.b16 %v76
    %v195 = vunpack.c.l.b16 %v77
    %v196 = vunpack.c.l.b16 %v78
    %v197 = vunpack.c.h.b16 %v78
    %v198 = vunpack.c.l.b16 %v79
    %v199 = vunpack.c.l.b16 %v80
    %v200 = vunpack.c.h.b16 %v80
    %v201 = vunpack.c.l.b16 %v81
    %v202 = vunpack.c.l.b16 %v82
    %v203 = vunpack.c.h.b16 %v82
    %v204 = vunpack.c.l.b16 %v83
    %v205 = vpack.c.b16 %v160, %v157
    %v206 = vpack.c.b16 %v161, %v158
    %v207 = vpack.c.b16 %v162, %v159
    %v208 = vpack.c.b16 %v166, %v163
    %v209 = vpack.c.b16 %v167, %v164
    %v210 = vpack.c.b16 %v168, %v165
    %v211 = vpack.c.b16 %v172, %v169
    %v212 = vpack.c.b16 %v173, %v170
    %v213 = vpack.c.b16 %v174, %v171
    %v214 = vpack.c.b16 %v178, %v175
    %v215 = vpack.c.b16 %v179, %v176
    %v216 = vpack.c.b16 %v180, %v177
    %v217 = vpack.c.b16 %v184, %v181
    %v218 = vpack.c.b16 %v185, %v182
    %v219 = vpack.c.b16 %v186, %v183
    %v220 = vpack.c.b16 %v190, %v187
    %v221 = vpack.c.b16 %v191, %v188
    %v222 = vpack.c.b16 %v192, %v189
    %v223 = vpack.c.b16 %v196, %v193
    %v224 = vpack.c.b16 %v197, %v194
    %v225 = vpack.c.b16 %v198, %v195
    %v226 = vpack.c.b16 %v202, %v199
    %v227 = vpack.c.b16 %v203, %v200
    %v228 = vpack.c.b16 %v204, %v201
    %253 = vmatprep.subr.bf16.mxu0 %v206
    %254 = vmatpush1.bf16.msra.mxu0 %v205
    %255 = vmatprep.subr.bf16.mxu0 %v209
    %256 = vmatpush1.bf16.msra.mxu0 %v208
    %257 = vmatprep.subr.bf16.mxu0 %v212
    %258 = vmatpush1.bf16.msra.mxu0 %v211
    %259 = vmatprep.subr.bf16.mxu0 %v215
    %260 = vmatpush1.bf16.msra.mxu0 %v214
    %261 = vmatprep.subr.bf16.mxu0 %v218
    %262 = vmatpush1.bf16.msra.mxu0 %v217
    %263 = vmatprep.subr.bf16.mxu0 %v221
    %264 = vmatpush1.bf16.msra.mxu0 %v220
    %265 = vmatprep.subr.bf16.mxu0 %v224
    %266 = vmatpush1.bf16.msra.mxu0 %v223
    %267 = vmatprep.subr.bf16.mxu0 %v227
    %268 = vmatpush1.bf16.msra.mxu0 %v226
    %269 = vmatprep.subr.bf16.mxu0 0
    %270 = vmatpush1.bf16.msra.mxu0 0
    %271 = vmatprep.subr.bf16.mxu0 0
    %272 = vmatpush1.bf16.msra.mxu0 0
    %273 = vmatprep.subr.bf16.mxu0 0
    %274 = vmatpush1.bf16.msra.mxu0 0
    %275 = vmatprep.subr.bf16.mxu0 0
    %276 = vmatpush1.bf16.msra.mxu0 0
    %277 = vmatprep.subr.bf16.mxu0 0
    %278 = vmatpush1.bf16.msra.mxu0 0
    %279 = vmatprep.subr.bf16.mxu0 0
    %280 = vmatpush1.bf16.msra.mxu0 0
    %281 = vmatprep.subr.bf16.mxu0 0
    %282 = vmatpush1.bf16.msra.mxu0 0
    %283 = vmatprep.subr.bf16.mxu0 0
    %284 = vmatpush1.bf16.msra.mxu0 0
    %285 = vmatprep.mubr.bf16.mxu0 0
    %286 = vmatmul.mubr.bf16.gmra.mrb[0].mxu0 %v117
    %v287 = vpop.f32.mrb[0].mxu0
    %v288 = vadd.f32 %v89, %v287
    %v289 = vpop.f32.mrb[0].mxu0
    %v290 = vadd.f32 %v93, %v289
    %v291 = vpop.f32.mrb[0].mxu0
    %v292 = vadd.f32 %v89, %v291
    %v293 = vpop.f32.mrb[0].mxu0
    %v294 = vadd.f32 %v93, %v293
    %295 = vmatprep.mubr.bf16.mxu0 0
    %296 = vmatmul.mubr.bf16.gmra.mrb[0].mxu0 %v118
    %v297 = vpop.f32.mrb[0].mxu0
    %v298 = vadd.f32 %v89, %v297
    %v299 = vpop.f32.mrb[0].mxu0
    %v300 = vadd.f32 %v93, %v299
    %v301 = vpop.f32.mrb[0].mxu0
    %v302 = vadd.f32 %v89, %v301
    %v303 = vpop.f32.mrb[0].mxu0
    %v304 = vadd.f32 %v93, %v303
    %305 = vmatprep.mubr.bf16.mxu0 0
    %306 = vmatmul.mubr.bf16.gmra.mrb[0].mxu0 %v119
    %v307 = vpop.f32.mrb[0].mxu0
    %v308 = vadd.f32 %v89, %v307
    %v309 = vpop.f32.mrb[0].mxu0
    %v310 = vadd.f32 %v93, %v309
    %v311 = vpop.f32.mrb[0].mxu0
    %v312 = vadd.f32 %v89, %v311
    %v313 = vpop.f32.mrb[0].mxu0
    %v314 = vadd.f32 %v93, %v313
    %315 = vmatprep.mubr.bf16.mxu0 0
    %316 = vmatmul.mubr.bf16.gmra.mrb[0].mxu0 %v120
    %v317 = vpop.f32.mrb[0].mxu0
    %v318 = vadd.f32 %v89, %v317
    %v319 = vpop.f32.mrb[0].mxu0
    %v320 = vadd.f32 %v93, %v319
    %v321 = vpop.f32.mrb[0].mxu0
    %v322 = vadd.f32 %v89, %v321
    %v323 = vpop.f32.mrb[0].mxu0
    %v324 = vadd.f32 %v93, %v323
    %325 = vdwg.mxu0
    %326 = vmatprep.subr.bf16.mxu0 0
    %327 = vmatpush1.bf16.msra.mxu0 %v207
    %328 = vmatprep.subr.bf16.mxu0 0
    %329 = vmatpush1.bf16.msra.mxu0 %v210
    %330 = vmatprep.subr.bf16.mxu0 0
    %331 = vmatpush1.bf16.msra.mxu0 %v213
    %332 = vmatprep.subr.bf16.mxu0 0
    %333 = vmatpush1.bf16.msra.mxu0 %v216
    %334 = vmatprep.subr.bf16.mxu0 0
    %335 = vmatpush1.bf16.msra.mxu0 %v219
    %336 = vmatprep.subr.bf16.mxu0 0
    %337 = vmatpush1.bf16.msra.mxu0 %v222
    %338 = vmatprep.subr.bf16.mxu0 0
    %339 = vmatpush1.bf16.msra.mxu0 %v225
    %340 = vmatprep.subr.bf16.mxu0 0
    %341 = vmatpush1.bf16.msra.mxu0 %v228
    %342 = vmatprep.subr.bf16.mxu0 0
    %343 = vmatpush1.bf16.msra.mxu0 0
    %344 = vmatprep.subr.bf16.mxu0 0
    %345 = vmatpush1.bf16.msra.mxu0 0
    %346 = vmatprep.subr.bf16.mxu0 0
    %347 = vmatpush1.bf16.msra.mxu0 0
    %348 = vmatprep.subr.bf16.mxu0 0
    %349 = vmatpush1.bf16.msra.mxu0 0
    %350 = vmatprep.subr.bf16.mxu0 0
    %351 = vmatpush1.bf16.msra.mxu0 0
    %352 = vmatprep.subr.bf16.mxu0 0
    %353 = vmatpush1.bf16.msra.mxu0 0
    %354 = vmatprep.subr.bf16.mxu0 0
    %355 = vmatpush1.bf16.msra.mxu0 0
    %356 = vmatprep.subr.bf16.mxu0 0
    %357 = vmatpush1.bf16.msra.mxu0 0
    %358 = vmatprep.mubr.bf16.mxu0 0
    %359 = vmatmul.mubr.bf16.gmra.mrb[0].mxu0 %v117
    %v360 = vpop.f32.mrb[0].mxu0
    %v361 = vadd.f32 %v97, %v360
    %v362 = vpop.f32.mrb[0].mxu0
    %v363 = vpop.f32.mrb[0].mxu0
    %v364 = vadd.f32 %v97, %v363
    %v365 = vpop.f32.mrb[0].mxu0
    %366 = vmatprep.mubr.bf16.mxu0 0
    %367 = vmatmul.mubr.bf16.gmra.mrb[0].mxu0 %v118
    %v368 = vpop.f32.mrb[0].mxu0
    %v369 = vadd.f32 %v97, %v368
    %v370 = vpop.f32.mrb[0].mxu0
    %v371 = vpop.f32.mrb[0].mxu0
    %v372 = vadd.f32 %v97, %v371
    %v373 = vpop.f32.mrb[0].mxu0
    %374 = vmatprep.mubr.bf16.mxu0 0
    %375 = vmatmul.mubr.bf16.gmra.mrb[0].mxu0 %v119
    %v376 = vpop.f32.mrb[0].mxu0
    %v377 = vadd.f32 %v97, %v376
    %v378 = vpop.f32.mrb[0].mxu0
    %v379 = vpop.f32.mrb[0].mxu0
    %v380 = vadd.f32 %v97, %v379
    %v381 = vpop.f32.mrb[0].mxu0
    %382 = vmatprep.mubr.bf16.mxu0 0
    %383 = vmatmul.mubr.bf16.gmra.mrb[0].mxu0 %v120
    %v384 = vpop.f32.mrb[0].mxu0
    %v385 = vadd.f32 %v97, %v384
    %v386 = vpop.f32.mrb[0].mxu0
    %v387 = vpop.f32.mrb[0].mxu0
    %v388 = vadd.f32 %v97, %v387
    %v389 = vpop.f32.mrb[0].mxu0
    %390 = vdwg.mxu0
    %v391 = vpack.c.bf16 %v292, %v288
    %v392 = vpack.c.bf16 %v294, %v290
    %v393 = vpack.c.bf16 %v364, %v361
    %v394 = vpack.c.bf16 %v302, %v298
    %v395 = vpack.c.bf16 %v304, %v300
    %v396 = vpack.c.bf16 %v372, %v369
    %v397 = vpack.c.bf16 %v312, %v308
    %v398 = vpack.c.bf16 %v314, %v310
    %v399 = vpack.c.bf16 %v380, %v377
    %v400 = vpack.c.bf16 %v322, %v318
    %v401 = vpack.c.bf16 %v324, %v320
    %v402 = vpack.c.bf16 %v388, %v385
    %v415 = vunpack.c.l.b16 %v391
    %v416 = vunpack.c.l.b16 %v392
    %v417 = vunpack.c.l.b16 %v393
    %v418 = vunpack.c.h.b16 %v391
    %v419 = vunpack.c.h.b16 %v392
    %v420 = vunpack.c.h.b16 %v393
    %v421 = vunpack.c.l.b16 %v394
    %v422 = vunpack.c.l.b16 %v395
    %v423 = vunpack.c.l.b16 %v396
    %v424 = vunpack.c.h.b16 %v394
    %v425 = vunpack.c.h.b16 %v395
    %v426 = vunpack.c.h.b16 %v396
    %v427 = vunpack.c.l.b16 %v397
    %v428 = vunpack.c.l.b16 %v398
    %v429 = vunpack.c.l.b16 %v399
    %v430 = vunpack.c.h.b16 %v397
    %v431 = vunpack.c.h.b16 %v398
    %v432 = vunpack.c.h.b16 %v399
    %v433 = vunpack.c.l.b16 %v400
    %v434 = vunpack.c.l.b16 %v401
    %v435 = vunpack.c.l.b16 %v402
    %v436 = vunpack.c.h.b16 %v400
    %v437 = vunpack.c.h.b16 %v401
    %v438 = vunpack.c.h.b16 %v402
    %v439 = vpack.c.b16 %v416, %v415
    %v440 = vpack.c.b16 %v417, %v417
    %v441 = vpack.c.b16 %v419, %v418
    %v442 = vpack.c.b16 %v420, %v420
    %v443 = vpack.c.b16 %v422, %v421
    %v444 = vpack.c.b16 %v423, %v423
    %v445 = vpack.c.b16 %v425, %v424
    %v446 = vpack.c.b16 %v426, %v426
    %v447 = vpack.c.b16 %v428, %v427
    %v448 = vpack.c.b16 %v429, %v429
    %v449 = vpack.c.b16 %v431, %v430
    %v450 = vpack.c.b16 %v432, %v432
    %v451 = vpack.c.b16 %v434, %v433
    %v452 = vpack.c.b16 %v435, %v435
    %v453 = vpack.c.b16 %v437, %v436
    %v454 = vpack.c.b16 %v438, %v438
    %471 = vst [vmem:[#allocation7] sm:$0xff] %v439
    %472 = vst [vmem:[#allocation7 + $0x8] sm:$0xf] %v440
    %473 = vst [vmem:[#allocation7 + $0xc] sm:$0xff] %v441
    %474 = vst [vmem:[#allocation7 + $0x14] sm:$0xf] %v442
    %475 = vst [vmem:[#allocation7 + $0x18] sm:$0xff] %v443
    %476 = vst [vmem:[#allocation7 + $0x20] sm:$0xf] %v444
    %477 = vst [vmem:[#allocation7 + $0x24] sm:$0xff] %v445
    %478 = vst [vmem:[#allocation7 + $0x2c] sm:$0xf] %v446
    %479 = vst [vmem:[#allocation7 + $0x30] sm:$0xff] %v447
    %480 = vst [vmem:[#allocation7 + $0x38] sm:$0xf] %v448
    %481 = vst [vmem:[#allocation7 + $0x3c] sm:$0xff] %v449
    %482 = vst [vmem:[#allocation7 + $0x44] sm:$0xf] %v450
    %483 = vst [vmem:[#allocation7 + $0x48] sm:$0xff] %v451
    %484 = vst [vmem:[#allocation7 + $0x50] sm:$0xf] %v452
    %485 = vst [vmem:[#allocation7 + $0x54] sm:$0xff] %v453
    %486 = vst [vmem:[#allocation7 + $0x5c] sm:$0xf] %v454
    // Predicated region
    $region22: #{tpu_custom_call.1} parent=1 // pred_check
      _
    $region23: #{tpu_custom_call.1} parent=1 // pred_check_branch
      %488 = sbr.rel (0) target = $region25
    $region24: #{tpu_custom_call.1} parent=1 // pred_region
      %s490 = ssub.s32 1536, 1536
      %491 = vsyncadd [#allocation4], %s490
      %s492 = sshll.u32 [#allocation7], 4
      %s493 = int_to_ptr.vmem [resolvable:$true] %s492
      %498 = dma.vmem_to_hbm [thread:$0]  %s493, 1536, %s3, [#allocation4], 192, 192, 12
    $region25: #{tpu_custom_call.1} parent=1 // pred_fallthru
      _
    // Predicated region
    $region26: #{tpu_custom_call.1} parent=1 // pred_check
      _
    $region27: #{tpu_custom_call.1} parent=1 // pred_check_branch
      %500 = sbr.rel (0) target = $region29
    $region28: #{tpu_custom_call.1} parent=1 // pred_region
      %501 = dma.done [#allocation4], 1536
    $region29: #{tpu_custom_call.1} parent=1 // pred_fallthru
      _
    %502 = vsyncpa [#allocation3], 1
    %503 = vsyncpa [#allocation6], 1
    %504 = vsyncpa [#allocation4], 1

</llo_original>
